<compile_context>
chip_gen: v5e
topology: v5e:2x2
jax: 0.10.0
libtpu: 0.0.40
codegen_flags: <defaults>
</compile_context>

<pallas_src>
import jax
import jax.numpy as jnp
from jax.experimental import pallas as pl
from jax.experimental.pallas import tpu as pltpu

_LANES = 128


def _copy_kernel(x_ref, o_ref):
    # Identity copy of one (block_rows, 128) lane-dense tile.  All blocks are
    # full unmasked tiles except the ragged last grid block, which Pallas
    # masks on store automatically.
    o_ref[...] = x_ref[...]


def _resolve_shape(shape, total):
    """Resolve a -1 wildcard with torch.reshape-style validation."""
    shape = tuple(int(s) for s in shape)
    if shape.count(-1) > 1:
        raise ValueError("reshape: only one dimension may be -1")
    if -1 in shape:
        idx = shape.index(-1)
        known = 1
        for j, s in enumerate(shape):
            if j != idx:
                known *= s
        if known == 0 or total % known != 0:
            raise ValueError(
                f"cannot reshape array of size {total} into shape {shape}")
        shape = shape[:idx] + (total // known,) + shape[idx + 1:]
    prod = 1
    for s in shape:
        prod *= s
    if prod != total:
        raise ValueError(
            f"cannot reshape array of size {total} into shape {shape}")
    return shape


def _chip_name():
    names = []
    try:
        info = pltpu.get_tpu_info()
        for attr in ("chip_version", "chip_name", "name", "version"):
            v = getattr(info, attr, None)
            if v is not None:
                names.append(str(v))
    except Exception:
        pass
    try:
        names.append(jax.devices()[0].device_kind)
    except Exception:
        pass
    return " ".join(names).lower()


def _target_block_bytes():
    # v7x HBM (~3.2 TB/s) drains a 2 MiB block in ~1.3 us, so the ~0.35 us
    # per-grid-step overhead would be a 15-25% tax: use 8 MiB blocks there
    # (4 double-buffered copies = 32 MiB, half of physical VMEM).  v5e/v6e
    # stay at 2 MiB, which already sits at ~86% of their HBM roofline.
    name = _chip_name()
    if "v7" in name or "tpu7" in name or "tpu_v7" in name:
        return 8 * 1024 * 1024
    return 2 * 1024 * 1024


def _build_impl(donate):
    def impl(x, out_shape):
        total = int(x.size)                       # static under jit
        dtype = x.dtype
        itemsize = jnp.dtype(dtype).itemsize
        # Native sublane packing: 8 rows f32, 16 bf16, 32 int8.
        sub = max(8, 32 // itemsize)

        rows = pl.cdiv(total, _LANES)
        padded = rows * _LANES != total           # only when numel % 128 != 0

        flat = jnp.ravel(x)                       # metadata-only for contiguous x
        if padded:
            # Rare corner case; this is a real copy of the array, accepted.
            flat = jnp.pad(flat, (0, rows * _LANES - total))
        flat2d = jnp.reshape(flat, (rows, _LANES))

        # Block size: generation-aware target, sublane-aligned, never padded
        # up past the array (ragged last block is handled by Pallas masking).
        tgt = _target_block_bytes()
        max_block_rows = max(sub, (tgt // (_LANES * itemsize)) // sub * sub)
        block_rows = rows if rows <= max_block_rows else max_block_rows
        if rows >= 2 * sub:
            # Keep >= 2 grid steps so v7x's two TensorCores both stream
            # (no-op cost, ~0.35 us, on single-TC v5e/v6e).
            half_rows = (rows + 1) // 2
            half_rows = ((half_rows + sub - 1) // sub) * sub
            block_rows = min(block_rows, half_rows)
        grid_n = pl.cdiv(rows, block_rows)

        # Alias output onto the kernel input only when it is guaranteed not
        # to cost an XLA defensive copy: padded path (fresh intermediate) or
        # explicit donation of x by the caller.
        alias = {0: 0} if (donate or padded) else {}

        vmem_limit = max(32 * 1024 * 1024,
                         5 * block_rows * _LANES * itemsize)

        out2d = pl.pallas_call(
            _copy_kernel,
            out_shape=jax.ShapeDtypeStruct((rows, _LANES), dtype),
            grid=(grid_n,),
            in_specs=[pl.BlockSpec((block_rows, _LANES), lambda i: (i, 0))],
            out_specs=pl.BlockSpec((block_rows, _LANES), lambda i: (i, 0)),
            input_output_aliases=alias,
            compiler_params=pltpu.CompilerParams(
                dimension_semantics=("parallel",),
                vmem_limit_bytes=vmem_limit,
            ),
            cost_estimate=pl.CostEstimate(
                flops=0,
                transcendentals=0,
                bytes_accessed=2 * rows * _LANES * itemsize,
            ),
        )(flat2d)

        out_flat = jnp.reshape(out2d, (rows * _LANES,))
        if padded:
            out_flat = out_flat[:total]
        return jnp.reshape(out_flat, out_shape)

    return jax.jit(impl, static_argnums=(1,),
                   donate_argnums=(0,) if donate else ())


_IMPLS = {False: _build_impl(False), True: _build_impl(True)}


def pallas_reshape(x, shape, *, donate=False):
    """Equivalent of torch: x.reshape(*shape).

    donate=True lets XLA reuse x's HBM buffer for the output (x becomes
    invalid afterwards); default False matches torch's non-consuming view
    semantics.
    """
    x = jnp.asarray(x)
    total = int(x.size)
    shape = _resolve_shape(shape, total)
    if total == 0:
        # Empty tensor: nothing to copy, pure metadata.
        return jnp.reshape(x, shape)
    return _IMPLS[bool(donate)](x, shape)


class Reshape:
    """Mirror of the PyTorch module: Reshape(*args)(x) == x.reshape(args)."""

    def __init__(self, *args):
        self.shape = args

    def __call__(self, x):
        return pallas_reshape(x, self.shape)


if __name__ == "__main__":
    key = jax.random.PRNGKey(0)
    k1, k2, k3 = jax.random.split(key, 3)

    # Case 1: NCHW-style feature map, flatten channel+spatial dims.
    # 2048 f32 -> rows=16 -> two full (8,128) blocks, parallel grid, no alias.
    x = jax.random.normal(k1, (2, 4, 16, 16), dtype=jnp.float32)
    y = Reshape(2, -1)(x)
    jax.block_until_ready(y)
    ref = jnp.reshape(x, (2, 1024))
    assert y.shape == (2, 1024)
    assert y.dtype == x.dtype
    assert bool(jnp.array_equal(y, ref))

    # Case 2: numel NOT divisible by 128 (exercises the small-pad + alias path).
    x2 = jax.random.normal(k2, (3, 5, 7), dtype=jnp.float32)
    y2 = Reshape(7, 15)(x2)
    jax.block_until_ready(y2)
    ref2 = jnp.reshape(x2, (7, 15))
    assert y2.shape == (7, 15)
    assert bool(jnp.array_equal(y2, ref2))

    # Case 3: 128-aligned but rows % block_rows != 0 -> ragged last grid block
    # handled by Pallas masking (no pre-pad, no post-slice).
    x3 = jax.random.normal(k3, (20, 128), dtype=jnp.float32)
    y3 = Reshape(4, 640)(x3)
    jax.block_until_ready(y3)
    ref3 = jnp.reshape(x3, (4, 640))
    assert y3.shape == (4, 640)
    assert bool(jnp.array_equal(y3, ref3))

    print("KERNEL_OK")
</pallas_src>

<mosaic_0001>
module attributes {stable_mosaic.version = 11 : i64} {
  func.func @_copy_kernel(%arg0: i32, %arg1: memref<8x128xf32, #tpu.memory_space<vmem>>, %arg2: memref<8x128xf32, #tpu.memory_space<vmem>>) attributes {dimension_semantics = [#tpu.dimension_semantics<parallel>], iteration_bounds = array<i64: 2>, scalar_prefetch = 0 : i64, scratch_operands = 0 : i64, tpu.core_type = #tpu.core_type<tc>, window_params = [{transform_indices = @transform_0, window_bounds = array<i64: 8, 128>}, {transform_indices = @transform_1, window_bounds = array<i64: 8, 128>}]} {
    %c0 = arith.constant 0 : index
    %c0_0 = arith.constant 0 : index
    %0 = vector.load %arg1[%c0, %c0_0] : memref<8x128xf32, #tpu.memory_space<vmem>>, vector<8x128xf32>
    %c0_1 = arith.constant 0 : index
    %c0_2 = arith.constant 0 : index
    %1 = vector.load %arg2[%c0_1, %c0_2] : memref<8x128xf32, #tpu.memory_space<vmem>>, vector<8x128xf32>
    tpu.vector_store %arg2[%c0_1, %c0_2], %0 {strides = array<i32>} : memref<8x128xf32, #tpu.memory_space<vmem>>, vector<8x128xf32>,
    return
  }
  func.func @transform_0(%arg0: i32) -> (i32, i32) {
    %c0_i32 = arith.constant 0 : i32
    %c0_i32_0 = arith.constant 0 : i32
    return %arg0, %c0_i32 : i32, i32
  }
  func.func @transform_1(%arg0: i32) -> (i32, i32) {
    %c0_i32 = arith.constant 0 : i32
    %c0_i32_0 = arith.constant 0 : i32
    return %arg0, %c0_i32 : i32, i32
  }
}

</mosaic_0001>

<llo_original>
// kernel: impl.1
$region0: #{impl.1}
  #allocation0 [shape = 'u32[]', space=smem, size = 0x4, offset = 0x4, fixed_abs, tag = 'smem constant byte address 0x4 - core index']
  #allocation1 [shape = 'u32[72,128]{1,0:T(1,128)}', space=vmem, size = 0x9000, scoped, tag = 'internal scratch']
  %s0 = inlined_call_operand.vmem [shape: f32[16,128], index: 0, kind: input, shape index: {}]
  %s1 = inlined_call_operand.vmem [shape: f32[16,128], index: 1, kind: output, shape index: {}]
  %s2 = sld [smem:[#allocation0]]
  $region37: #{impl.1} parent=0
    _
  %s4 = ssub.s32 1, %s2
  %s5 = scalar_select 0, %s4, %s2
  loop: start=0, step=1, limit=4
  $region2: #{impl.1} parent=0 // loop_pre_header
    _
  $region3: #{impl.1} parent=0 // loop_header
    %s7 = sphi 0, %s11
    %p8 = scmp.ge.s32.totalorder %s7, 4
    %s17 = sphi 0, %s19
    %s20 = sphi 0, %s17
    %s21 = sphi 0, %s20
    %s37 = sphi 0, %s21
    %s43 = sphi 0, %s45
    %s46 = sphi 0, %s43
    %s47 = sphi 0, %s46
    %s63 = sphi 0, %s47
  $region4: #{impl.1} parent=0 // loop_header_branch
    %10 = sbr.rel (%p8) target = $region8
  $region5: #{impl.1} parent=0 // loop_body
    %s12 = ssub.s32 %s7, 1
    %s13 = ssub.s32 %s7, 2
    %s14 = sadd.s32 %s7, 1
    %s15 = ssub.s32 %s7, %s14
    %p16 = scmp.eq.s32.totalorder %s15, 0
    %s18 = sadd.s32 %s17, 1
    %s19 = scalar_select %p16, %s17, %s18
    %p22 = pneg %p16
    %p23 = scmp.eq.s32.totalorder %s7, 1
    %p24 = por %p22, %p23
    %p25 = scmp.ne.s32.totalorder %s17, %s20
    %p26 = scmp.eq.s32.totalorder %s7, 0
    %p27 = por %p25, %p26
    %p28 = scmp.ne.s32.totalorder %s17, %s20
    %p29 = scmp.eq.s32.totalorder %s12, 1
    %p30 = por %p28, %p29
    %p31 = scmp.ne.s32.totalorder %s20, %s21
    %p32 = scmp.eq.s32.totalorder %s12, 0
    %p33 = por %p31, %p32
    %p34 = scmp.ne.s32.totalorder %s20, %s21
    %p35 = scmp.eq.s32.totalorder %s13, 1
    %p36 = por %p34, %p35
    %p38 = scmp.ne.s32.totalorder %s21, %s37
    %p39 = scmp.eq.s32.totalorder %s13, 0
    %p40 = por %p38, %p39
    %s41 = ssub.s32 %s7, %s14
    %p42 = scmp.eq.s32.totalorder %s41, 0
    %s44 = sadd.s32 %s43, 1
    %s45 = scalar_select %p42, %s43, %s44
    %p48 = pneg %p42
    %p49 = scmp.eq.s32.totalorder %s7, 1
    %p50 = por %p48, %p49
    %p51 = scmp.ne.s32.totalorder %s43, %s46
    %p52 = scmp.eq.s32.totalorder %s7, 0
    %p53 = por %p51, %p52
    %p54 = scmp.ne.s32.totalorder %s43, %s46
    %p55 = scmp.eq.s32.totalorder %s12, 1
    %p56 = por %p54, %p55
    %p57 = scmp.ne.s32.totalorder %s46, %s47
    %p58 = scmp.eq.s32.totalorder %s12, 0
    %p59 = por %p57, %p58
    %p60 = scmp.ne.s32.totalorder %s46, %s47
    %p61 = scmp.eq.s32.totalorder %s13, 1
    %p62 = por %p60, %p61
    %p64 = scmp.ne.s32.totalorder %s47, %s63
    %p65 = scmp.eq.s32.totalorder %s13, 0
    %p66 = por %p64, %p65
    %p67 = scmp.le.s32.totalorder 1, %s7
    %p68 = scmp.lt.s32.totalorder %s7, 3
    %p69 = pnand %p67, %p68
    %p70 = pneg %p69
    // Predicated region
    $region9: #{impl.1} parent=5 // pred_check
      _
    $region10: #{impl.1} parent=5 // pred_check_branch
      %72 = sbr.rel (%p69) target = $region12
    $region11: #{impl.1} parent=5 // pred_region
      %s73 = ssub.s32 %s7, 1
    $region12: #{impl.1} parent=5 // pred_fallthru
      _
    %p74 = scmp.lt.s32.totalorder %s7, 2
    // Predicated region
    $region13: #{impl.1} parent=5 // pred_check
      %p75 = pneg %p74
    $region14: #{impl.1} parent=5 // pred_check_branch
      %77 = sbr.rel (%p75) target = $region16
    $region15: #{impl.1} parent=5 // pred_region
      // Predicated region
      $region17: #{impl.1} parent=15 // pred_check
        %p78 = pneg %p27
      $region18: #{impl.1} parent=15 // pred_check_branch
        %80 = sbr.rel (%p78) target = $region20
      $region19: #{impl.1} parent=15 // pred_region
        %p81 = scmp.lt.s32.totalorder %s7, 1
        %s82 = scalar_select %p81, %s7, 1
        %s83 = smul.addr %s82, 8
        %s84 = scalar_lea.vmem %s0, %s83
      $region20: #{impl.1} parent=15 // pred_fallthru
        _
    $region16: #{impl.1} parent=5 // pred_fallthru
      _
    %p85 = scmp.le.s32.totalorder 1, %s7
    %p86 = scmp.lt.s32.totalorder %s7, 3
    %p87 = pnand %p85, %p86
    %p88 = pneg %p87
    // Predicated region
    $region21: #{impl.1} parent=5 // pred_check
      _
    $region22: #{impl.1} parent=5 // pred_check_branch
      %90 = sbr.rel (%p87) target = $region24
    $region23: #{impl.1} parent=5 // pred_region
      %s91 = ssub.s32 %s7, 1
      %p92 = scmp.lt.s32.totalorder %s12, 1
      %s93 = scalar_select %p92, %s12, 1
      %s94 = smul.addr %s93, 8
      %s95 = scalar_lea.vmem %s0, %s94
      %p96 = pneg %p33
      %p97 = pneg %p30
      %p98 = pneg %p59
      %p99 = pneg %p56
      %p100 = scmp.lt.s32.totalorder %s12, 1
      %s101 = scalar_select %p100, %s12, 1
      %s102 = smul.addr %s101, 8
      %s103 = scalar_lea.vmem %s1, %s102
      %p104 = scmp.lt.s32.totalorder %s12, 1
      %s105 = scalar_select %p104, %s12, 1
      %s106 = smul.addr %s105, 8
      %s107 = scalar_lea.vmem %s0, %s106
      %p108 = scmp.lt.s32.totalorder %s12, 1
      %s109 = scalar_select %p108, %s12, 1
      %s110 = smul.addr %s109, 8
      %s111 = scalar_lea.vmem %s1, %s110
      %v112 = vld [vmem:[%s107] sm:$0xff]
      %113 = vst [vmem:[%s111] sm:$0xff] %v112
      %p114 = scmp.lt.s32.totalorder %s12, 1
      %s115 = scalar_select %p114, %s12, 1
      %s116 = smul.addr %s115, 8
      %s117 = scalar_lea.vmem %s1, %s116
      // Predicated region
      $region25: #{impl.1} parent=23 // pred_check
        %p118 = pneg %p56
      $region26: #{impl.1} parent=23 // pred_check_branch
        %120 = sbr.rel (%p118) target = $region28
      $region27: #{impl.1} parent=23 // pred_region
        _
      $region28: #{impl.1} parent=23 // pred_fallthru
        _
    $region24: #{impl.1} parent=5 // pred_fallthru
      _
    %p121 = scmp.le.s32.totalorder 2, %s7
    // Predicated region
    $region29: #{impl.1} parent=5 // pred_check
      %p122 = pneg %p121
    $region30: #{impl.1} parent=5 // pred_check_branch
      %124 = sbr.rel (%p122) target = $region32
    $region31: #{impl.1} parent=5 // pred_region
      %s125 = ssub.s32 %s7, 2
      // Predicated region
      $region33: #{impl.1} parent=31 // pred_check
        %p126 = pneg %p62
      $region34: #{impl.1} parent=31 // pred_check_branch
        %128 = sbr.rel (%p126) target = $region36
      $region35: #{impl.1} parent=31 // pred_region
        %p129 = scmp.lt.s32.totalorder %s13, 1
        %s130 = scalar_select %p129, %s13, 1
        %s131 = smul.addr %s130, 8
        %s132 = scalar_lea.vmem %s1, %s131
      $region36: #{impl.1} parent=31 // pred_fallthru
        _
    $region32: #{impl.1} parent=5 // pred_fallthru
      _
  $region6: #{impl.1} parent=0 // loop_footer
    %s11 = sadd.s32 1, %s7
  $region7: #{impl.1} parent=0 // loop_footer_branch
    %6 = sbr.rel target = $region3
  $region8: #{impl.1} parent=0 // loop_exit
    _

</llo_original>
